<compile_context>
chip_gen: v7x
topology: tpu7x:2x2x1
jax: 0.10.0
libtpu: 0.0.40
codegen_flags: <defaults>
</compile_context>

<pallas_src>
import numpy as np
import jax
import jax.numpy as jnp
from jax.experimental import pallas as pl
from jax.experimental.pallas import tpu as pltpu

NUM_CLASSES = 8          # small synthetic class count (module default is 80)
LAMBDA_COORD = 5.0
LAMBDA_NOOBJ = 0.5

_LANE_TILE_CAP = 32768   # 13 * 32768 * 4 B ~= 1.7 MB per input block


# ----------------------------- Pallas kernel -------------------------------

def _yolo_scale_kernel(pred_ref, tgt_ref, out_ref, acc_ref):
    # pred_ref/tgt_ref: (C5, TN) f32 blocks (lane-dense along N).
    # acc_ref: (8, TN) f32 scratch, per-lane partial sums, resident over grid.
    # out_ref: (8, 128) f32, written once at the last grid step.
    step = pl.program_id(0)

    @pl.when(step == 0)
    def _init():
        acc_ref[...] = jnp.zeros_like(acc_ref)

    pred = pred_ref[...]                      # (C5, TN)
    tgt = tgt_ref[...]                        # (C5, TN)
    tn = pred.shape[1]

    obj = tgt[4:5, :]                         # (1, TN) objectness mask row

    # Coordinate terms (rows 0..3 live in the first sublane granule).
    sig_xy = jax.nn.sigmoid(pred[0:2, :])
    d_xy = sig_xy - tgt[0:2, :]
    d_wh = pred[2:4, :] - tgt[2:4, :]
    sq_xy = jnp.sum(d_xy * d_xy, axis=0, keepdims=True)     # (1, TN)
    sq_wh = jnp.sum(d_wh * d_wh, axis=0, keepdims=True)     # (1, TN)

    # Numerically stable BCE-with-logits: max(x,0) - x*t + log1p(exp(-|x|)).
    # Computed over the full channel block (same vreg count as slicing rows
    # 4.. since C5=13 spans two sublane granules either way); rows 0..3 of the
    # result are simply discarded.
    bce = (jnp.maximum(pred, 0.0) - pred * tgt
           + jnp.log1p(jnp.exp(-jnp.abs(pred))))
    bce_obj = bce[4:5, :]                                    # (1, TN)
    bce_cls = jnp.sum(bce[5:, :], axis=0, keepdims=True)     # (1, TN)

    row_xy = obj * sq_xy
    row_wh = obj * sq_wh
    row_obj = obj * bce_obj
    row_noobj = bce_obj - row_obj            # (1 - obj) * bce_obj
    row_cls = obj * bce_cls
    row_nobj = obj                           # counts objects

    upd = jnp.concatenate(
        [row_xy, row_wh, row_obj, row_noobj, row_cls, row_nobj,
         jnp.zeros((2, tn), jnp.float32)], axis=0)           # (8, TN)
    acc_ref[...] += upd

    @pl.when(step == pl.num_programs(0) - 1)
    def _finalize():
        totals = jnp.sum(acc_ref[...], axis=1, keepdims=True)   # (8, 1)
        out_ref[...] = jnp.broadcast_to(totals, (8, 128))


def _round_up(x, m):
    return ((x + m - 1) // m) * m


def yolo_scale_sums(pred_cn, tgt_cn):
    """Masked partial sums for one scale.

    Inputs are (C5, N) float32 (channel-major, lane-dense).
    Returns [sum_xy_sq, sum_wh_sq, sum_obj_bce, sum_noobj_bce, sum_cls_bce,
             n_obj] as a length-6 f32 vector.
    """
    c5, n = pred_cn.shape
    if n <= _LANE_TILE_CAP:
        tn = _round_up(n, 128)
    else:
        tn = _LANE_TILE_CAP
    n_pad = _round_up(n, tn)
    if n_pad != n:
        pad = n_pad - n
        # pred padded with -100 logits, tgt with 0 -> exact zero contribution
        # to every masked sum (including the no-object BCE term).
        pred_cn = jnp.pad(pred_cn, ((0, 0), (0, pad)), constant_values=-100.0)
        tgt_cn = jnp.pad(tgt_cn, ((0, 0), (0, pad)), constant_values=0.0)

    grid = (n_pad // tn,)
    out = pl.pallas_call(
        _yolo_scale_kernel,
        out_shape=jax.ShapeDtypeStruct((8, 128), jnp.float32),
        grid_spec=pltpu.PrefetchScalarGridSpec(
            num_scalar_prefetch=0,
            grid=grid,
            in_specs=[pl.BlockSpec((c5, tn), lambda i: (0, i)),
                      pl.BlockSpec((c5, tn), lambda i: (0, i))],
            out_specs=pl.BlockSpec((8, 128), lambda i: (0, 0)),
            scratch_shapes=[pltpu.VMEM((8, tn), jnp.float32)]),
        compiler_params=pltpu.CompilerParams(
            dimension_semantics=("arbitrary",),
            vmem_limit_bytes=32 * 1024 * 1024),
    )(pred_cn, tgt_cn)
    return out[:6, 0]


# ------------------------- host-side target building -----------------------
# Data-dependent per-box assignment (best-anchor IoU + scatter) stays in
# NumPy glue, exactly mirroring the torch Python loop.
# TODO(synk): in a real training loop this host loop + H2D copy should be
# vectorized / precomputed; it is not part of the Pallas hot path.

def _anchor_iou(aw, ah, bw, bh):
    inter = min(aw, bw) * min(ah, bh)
    union = aw * ah + bw * bh - inter + 1e-16
    return inter / union


def build_targets_np(targets, anchors, grid_size, num_classes):
    batch_size = len(targets)
    num_anchors = len(anchors)
    c5 = num_classes + 5
    tgt = np.zeros((batch_size, num_anchors, grid_size, grid_size, c5), np.float32)
    target_count = 0
    for b in range(batch_size):
        boxes = np.asarray(targets[b], np.float32)
        if boxes.size == 0:
            continue
        for box in boxes:
            class_idx = int(box[0])
            if class_idx < 0 or class_idx >= num_classes:
                continue
            gx, gy = box[1] * grid_size, box[2] * grid_size
            gw, gh = box[3] * grid_size, box[4] * grid_size
            gi, gj = int(gx), int(gy)
            if gi >= grid_size or gj >= grid_size or gi < 0 or gj < 0:
                continue
            ious = [_anchor_iou(aw, ah, box[3], box[4]) for (aw, ah) in anchors]
            best = int(np.argmax(ious))
            if ious[best] > 0.2:
                tgt[b, best, gj, gi, 0] = gx - gi
                tgt[b, best, gj, gi, 1] = gy - gj
                tgt[b, best, gj, gi, 2] = np.log(gw / anchors[best][0] + 1e-16)
                tgt[b, best, gj, gi, 3] = np.log(gh / anchors[best][1] + 1e-16)
                tgt[b, best, gj, gi, 4] = 1.0
                tgt[b, best, gj, gi, 5 + class_idx] = 1.0
                target_count += 1
    return tgt, target_count


# ------------------------------- full loss ----------------------------------

class YOLOLossPallas:
    def __init__(self, anchors, grid_sizes, num_classes=NUM_CLASSES):
        self.anchors = anchors
        self.grid_sizes = grid_sizes
        self.num_classes = num_classes

    def __call__(self, predictions, targets):
        if len(targets) == 0:
            return jnp.float32(0.0)
        C = self.num_classes
        c5 = C + 5
        coord = jnp.float32(0.0)
        obj = jnp.float32(0.0)
        noobj = jnp.float32(0.0)
        cls = jnp.float32(0.0)
        num_scale_losses = 0
        for scale_idx, (pred, g) in enumerate(zip(predictions, self.grid_sizes)):
            b = pred.shape[0]
            a = len(self.anchors[scale_idx])
            # NCHW -> (B, A, C5, G, G) -> channel-major (C5, B, A, G, G) -> (C5, N)
            p = pred.reshape(b, a, c5, g, g)
            p = jnp.transpose(p, (2, 0, 1, 3, 4)).reshape(c5, -1)
            p = p.astype(jnp.float32)
            tgt_np, target_count = build_targets_np(
                targets, self.anchors[scale_idx], g, C)
            if target_count == 0:
                continue
            num_scale_losses += 1
            tgt_cn = np.moveaxis(tgt_np, -1, 0).reshape(c5, -1)
            tgt = jnp.asarray(np.ascontiguousarray(tgt_cn))

            sums = yolo_scale_sums(p, tgt)
            s_xy, s_wh, s_obj, s_noobj, s_cls, n_obj = (
                sums[0], sums[1], sums[2], sums[3], sums[4], sums[5])
            n_total = p.shape[1]
            n_noobj = n_total - n_obj

            coord = coord + s_xy / (2.0 * n_obj) + s_wh / (2.0 * n_obj)
            obj = obj + s_obj / n_obj
            # TODO(synk): PyTorch randomly subsamples up to 3*obj_count
            # no-object cells via torch.randperm; here we take the
            # deterministic mean over all no-object cells (equal in
            # expectation, no clean Pallas equivalent for host-side randperm).
            noobj = noobj + s_noobj / n_noobj
            cls = cls + s_cls / (n_obj * C)

        if num_scale_losses > 0:
            return (LAMBDA_COORD * coord + obj
                    + LAMBDA_NOOBJ * noobj + cls) / num_scale_losses
        return jnp.float32(0.1)


# ------------------------- pure NumPy reference -----------------------------

def _scale_sums_np(pred_flat, tgt_flat):
    p = pred_flat.astype(np.float64)
    t = tgt_flat.astype(np.float64)
    objm = t[:, 4:5]
    sig = 1.0 / (1.0 + np.exp(-p))
    bce = np.maximum(p, 0.0) - p * t + np.log1p(np.exp(-np.abs(p)))
    s_xy = np.sum(objm * (sig[:, 0:2] - t[:, 0:2]) ** 2)
    s_wh = np.sum(objm * (p[:, 2:4] - t[:, 2:4]) ** 2)
    s_obj = np.sum(objm[:, 0] * bce[:, 4])
    s_noobj = np.sum((1.0 - objm[:, 0]) * bce[:, 4])
    s_cls = np.sum(objm * bce[:, 5:])
    n_obj = np.sum(objm)
    return s_xy, s_wh, s_obj, s_noobj, s_cls, n_obj


def _reference_loss_np(predictions, targets, anchors, grid_sizes, num_classes):
    c5 = num_classes + 5
    coord = obj = noobj = cls = 0.0
    num_scale_losses = 0
    for scale_idx, (pred, g) in enumerate(zip(predictions, grid_sizes)):
        b = pred.shape[0]
        a = len(anchors[scale_idx])
        p = (pred.reshape(b, a, c5, g, g)
                 .transpose(0, 1, 3, 4, 2).reshape(-1, c5))
        tgt_np, target_count = build_targets_np(targets, anchors[scale_idx], g,
                                                num_classes)
        if target_count == 0:
            continue
        num_scale_losses += 1
        s_xy, s_wh, s_obj, s_noobj, s_cls, n_obj = _scale_sums_np(
            p, tgt_np.reshape(-1, c5))
        n_noobj = p.shape[0] - n_obj
        coord += s_xy / (2.0 * n_obj) + s_wh / (2.0 * n_obj)
        obj += s_obj / n_obj
        noobj += s_noobj / n_noobj
        cls += s_cls / (n_obj * num_classes)
    if num_scale_losses > 0:
        return (LAMBDA_COORD * coord + obj
                + LAMBDA_NOOBJ * noobj + cls) / num_scale_losses
    return 0.1


# ---------------------------------- main -------------------------------------

if __name__ == "__main__":
    B = 2
    anchors = [
        [(0.28, 0.22), (0.38, 0.48), (0.90, 0.78)],   # coarse scale (G=16)
        [(0.07, 0.15), (0.15, 0.11), (0.14, 0.29)],   # fine scale   (G=8)
    ]
    grid_sizes = [16, 8]
    c5 = NUM_CLASSES + 5

    key = jax.random.PRNGKey(0)
    k0, k1 = jax.random.split(key)
    predictions = [
        jax.random.normal(k0, (B, 3 * c5, grid_sizes[0], grid_sizes[0]),
                          dtype=jnp.float32),
        jax.random.normal(k1, (B, 3 * c5, grid_sizes[1], grid_sizes[1]),
                          dtype=jnp.float32),
    ]
    targets = [
        np.array([[1, 0.50, 0.52, 0.30, 0.40],
                  [3, 0.20, 0.25, 0.10, 0.12]], np.float32),
        np.array([[0, 0.70, 0.68, 0.55, 0.60]], np.float32),
    ]

    loss_fn = YOLOLossPallas(anchors, grid_sizes, NUM_CLASSES)
    loss = loss_fn(predictions, targets)
    loss = jax.block_until_ready(loss)

    ref = _reference_loss_np([np.asarray(p) for p in predictions], targets,
                             anchors, grid_sizes, NUM_CLASSES)
    np.testing.assert_allclose(float(loss), float(ref), rtol=2e-3, atol=2e-3)
    print("KERNEL_OK")
</pallas_src>

<mosaic_0001>
module attributes {stable_mosaic.version = 11 : i64} {
  func.func @_yolo_scale_kernel(%arg0: i32, %arg1: memref<13x1536xf32, #tpu.memory_space<vmem>>, %arg2: memref<13x1536xf32, #tpu.memory_space<vmem>>, %arg3: memref<8x128xf32, #tpu.memory_space<vmem>>, %arg4: memref<8x1536xf32, #tpu.memory_space<vmem>>) attributes {dimension_semantics = [#tpu.dimension_semantics<arbitrary>], iteration_bounds = array<i64: 1>, scalar_prefetch = 0 : i64, scratch_operands = 1 : i64, tpu.core_type = #tpu.core_type<tc>, window_params = [{transform_indices = @transform_0, window_bounds = array<i64: 13, 1536>}, {transform_indices = @transform_1, window_bounds = array<i64: 13, 1536>}, {pipeline_mode = #tpu.pipeline_mode<synchronous>, transform_indices = @transform_2, window_bounds = array<i64: 8, 128>}]} {
    %c0_i32 = arith.constant 0 : i32
    %0 = arith.cmpi eq, %arg0, %c0_i32 : i32
    %1 = arith.extui %0 : i1 to i32
    %c0_i32_0 = arith.constant 0 : i32
    %2 = arith.cmpi ne, %1, %c0_i32_0 : i32
    scf.if %2 {
      %cst_16 = arith.constant 0.000000e+00 : f32
      %50 = vector.broadcast %cst_16 : f32 to vector<8x1536xf32>
      %c0_17 = arith.constant 0 : index
      %c0_18 = arith.constant 0 : index
      %51 = vector.load %arg4[%c0_17, %c0_18] : memref<8x1536xf32, #tpu.memory_space<vmem>>, vector<8x1536xf32>
      tpu.vector_store %arg4[%c0_17, %c0_18], %50 {strides = array<i32>} : memref<8x1536xf32, #tpu.memory_space<vmem>>, vector<8x1536xf32>,
    } else {
    }
    %c0 = arith.constant 0 : index
    %c0_1 = arith.constant 0 : index
    %3 = vector.load %arg1[%c0, %c0_1] : memref<13x1536xf32, #tpu.memory_space<vmem>>, vector<13x1536xf32>
    %c0_2 = arith.constant 0 : index
    %c0_3 = arith.constant 0 : index
    %4 = vector.load %arg2[%c0_2, %c0_3] : memref<13x1536xf32, #tpu.memory_space<vmem>>, vector<13x1536xf32>
    %5 = vector.extract_strided_slice %4 {offsets = [4, 0], sizes = [1, 1536], strides = [1, 1]} : vector<13x1536xf32> to vector<1x1536xf32>
    %6 = vector.extract_strided_slice %3 {offsets = [0, 0], sizes = [2, 1536], strides = [1, 1]} : vector<13x1536xf32> to vector<2x1536xf32>
    %7 = arith.negf %6 : vector<2x1536xf32>
    %8 = math.exp %7 : vector<2x1536xf32>
    %cst = arith.constant 1.000000e+00 : f32
    %9 = vector.broadcast %cst : f32 to vector<2x1536xf32>
    %10 = arith.addf %9, %8 : vector<2x1536xf32>
    %11 = arith.divf %9, %10 : vector<2x1536xf32>
    %12 = vector.extract_strided_slice %4 {offsets = [0, 0], sizes = [2, 1536], strides = [1, 1]} : vector<13x1536xf32> to vector<2x1536xf32>
    %13 = arith.subf %11, %12 : vector<2x1536xf32>
    %14 = vector.extract_strided_slice %3 {offsets = [2, 0], sizes = [2, 1536], strides = [1, 1]} : vector<13x1536xf32> to vector<2x1536xf32>
    %15 = vector.extract_strided_slice %4 {offsets = [2, 0], sizes = [2, 1536], strides = [1, 1]} : vector<13x1536xf32> to vector<2x1536xf32>
    %16 = arith.subf %14, %15 : vector<2x1536xf32>
    %17 = arith.mulf %13, %13 : vector<2x1536xf32>
    %cst_4 = arith.constant dense<0.000000e+00> : vector<1536xf32>
    %18 = vector.multi_reduction <add>, %17, %cst_4 [0] : vector<2x1536xf32> to vector<1536xf32>
    %19 = vector.shape_cast %18 : vector<1536xf32> to vector<1x1536xf32>
    %20 = arith.mulf %16, %16 : vector<2x1536xf32>
    %cst_5 = arith.constant dense<0.000000e+00> : vector<1536xf32>
    %21 = vector.multi_reduction <add>, %20, %cst_5 [0] : vector<2x1536xf32> to vector<1536xf32>
    %22 = vector.shape_cast %21 : vector<1536xf32> to vector<1x1536xf32>
    %cst_6 = arith.constant 0.000000e+00 : f32
    %23 = vector.broadcast %cst_6 : f32 to vector<13x1536xf32>
    %24 = arith.maximumf %3, %23 : vector<13x1536xf32>
    %25 = arith.mulf %3, %4 : vector<13x1536xf32>
    %26 = arith.subf %24, %25 : vector<13x1536xf32>
    %27 = math.absf %3 : vector<13x1536xf32>
    %cst_7 = arith.constant 0.000000e+00 : f32
    %28 = vector.broadcast %cst_7 : f32 to vector<13x1536xf32>
    %29 = arith.subf %28, %27 : vector<13x1536xf32>
    %30 = math.exp %29 : vector<13x1536xf32>
    %31 = math.log1p %30 : vector<13x1536xf32>
    %32 = arith.addf %26, %31 : vector<13x1536xf32>
    %33 = vector.extract_strided_slice %32 {offsets = [4, 0], sizes = [1, 1536], strides = [1, 1]} : vector<13x1536xf32> to vector<1x1536xf32>
    %34 = vector.extract_strided_slice %32 {offsets = [5, 0], sizes = [8, 1536], strides = [1, 1]} : vector<13x1536xf32> to vector<8x1536xf32>
    %cst_8 = arith.constant dense<0.000000e+00> : vector<1536xf32>
    %35 = vector.multi_reduction <add>, %34, %cst_8 [0] : vector<8x1536xf32> to vector<1536xf32>
    %36 = vector.shape_cast %35 : vector<1536xf32> to vector<1x1536xf32>
    %37 = arith.mulf %5, %19 : vector<1x1536xf32>
    %38 = arith.mulf %5, %22 : vector<1x1536xf32>
    %39 = arith.mulf %5, %33 : vector<1x1536xf32>
    %40 = arith.subf %33, %39 : vector<1x1536xf32>
    %41 = arith.mulf %5, %36 : vector<1x1536xf32>
    %cst_9 = arith.constant 0.000000e+00 : f32
    %42 = vector.broadcast %cst_9 : f32 to vector<2x1536xf32>
    %43 = tpu.concatenate %37, %38, %39, %40, %41, %5, %42 in 0 : vector<1x1536xf32>, vector<1x1536xf32>, vector<1x1536xf32>, vector<1x1536xf32>, vector<1x1536xf32>, vector<1x1536xf32>, vector<2x1536xf32> -> vector<8x1536xf32>
    %c0_10 = arith.constant 0 : index
    %c0_11 = arith.constant 0 : index
    %44 = vector.load %arg4[%c0_10, %c0_11] : memref<8x1536xf32, #tpu.memory_space<vmem>>, vector<8x1536xf32>
    %45 = arith.addf %44, %43 : vector<8x1536xf32>
    %c0_12 = arith.constant 0 : index
    %c0_13 = arith.constant 0 : index
    %46 = vector.load %arg4[%c0_12, %c0_13] : memref<8x1536xf32, #tpu.memory_space<vmem>>, vector<8x1536xf32>
    tpu.vector_store %arg4[%c0_12, %c0_13], %45 {strides = array<i32>} : memref<8x1536xf32, #tpu.memory_space<vmem>>, vector<8x1536xf32>,
    %c0_i32_14 = arith.constant 0 : i32
    %47 = arith.cmpi eq, %arg0, %c0_i32_14 : i32
    %48 = arith.extui %47 : i1 to i32
    %c0_i32_15 = arith.constant 0 : i32
    %49 = arith.cmpi ne, %48, %c0_i32_15 : i32
    scf.if %49 {
      %c0_16 = arith.constant 0 : index
      %c0_17 = arith.constant 0 : index
      %50 = vector.load %arg4[%c0_16, %c0_17] : memref<8x1536xf32, #tpu.memory_space<vmem>>, vector<8x1536xf32>
      %cst_18 = arith.constant dense<0.000000e+00> : vector<8xf32>
      %51 = vector.multi_reduction <add>, %50, %cst_18 [1] : vector<8x1536xf32> to vector<8xf32>
      %52 = vector.shape_cast %51 : vector<8xf32> to vector<8x1xf32>
      %53 = vector.shape_cast %52 : vector<8x1xf32> to vector<8x1xf32>
      %54 = vector.broadcast %53 : vector<8x1xf32> to vector<8x128xf32>
      %c0_19 = arith.constant 0 : index
      %c0_20 = arith.constant 0 : index
      %55 = vector.load %arg3[%c0_19, %c0_20] : memref<8x128xf32, #tpu.memory_space<vmem>>, vector<8x128xf32>
      tpu.vector_store %arg3[%c0_19, %c0_20], %54 {strides = array<i32>} : memref<8x128xf32, #tpu.memory_space<vmem>>, vector<8x128xf32>,
    } else {
    }
    return
  }
  func.func @transform_0(%arg0: i32) -> (i32, i32) {
    %c0_i32 = arith.constant 0 : i32
    %c0_i32_0 = arith.constant 0 : i32
    return %c0_i32, %arg0 : i32, i32
  }
  func.func @transform_1(%arg0: i32) -> (i32, i32) {
    %c0_i32 = arith.constant 0 : i32
    %c0_i32_0 = arith.constant 0 : i32
    return %c0_i32, %arg0 : i32, i32
  }
  func.func @transform_2(%arg0: i32) -> (i32, i32) {
    %c0_i32 = arith.constant 0 : i32
    %c0_i32_0 = arith.constant 0 : i32
    %c0_i32_1 = arith.constant 0 : i32
    return %c0_i32, %c0_i32_0 : i32, i32
  }
}

</mosaic_0001>

<llo_original>
// kernel: tpu_custom_call.1
$region0: #{tpu_custom_call.1}
  #allocation0 [shape = 'u32[]', space=smem, size = 0x4, offset = 0x4, fixed_abs, tag = 'smem constant byte address 0x4 - core index']
  #allocation1 [shape = 'u32[144,128]{1,0:T(1,128)}', space=vmem, size = 0x12000, scoped, tag = 'internal scratch']
  #allocation2 [shape = 'f32[8,1536]{1,0:T(8,128)}', space=vmem, size = 0xc000, scoped, tag = 'scratch operand']
  %s0 = inlined_call_operand.hbm [shape: f32[13,1536], index: 0, kind: input, shape index: {}]
  %s1 = inlined_call_operand.hbm [shape: f32[13,1536], index: 1, kind: input, shape index: {}]
  %s2 = inlined_call_operand.hbm [shape: f32[8,128], index: 2, kind: output, shape index: {}]
  %s3 = sld [smem:[#allocation0]]
  $region34: #{tpu_custom_call.1} parent=0
    _
  %s5 = ssub.s32 1, %s3
  %s6 = scalar_select 0, %s5, %s3
  $region1: #{tpu_custom_call.1} parent=0
    #allocation3 [shape = 'u8[98304]{0}', space=vmem, size = 0x18000, scoped, tag = 'input window, operand 0, single buffered']
    #allocation4 [shape = 's32[1]{0}', space=sflag, size = 0x4, scoped, tag = 'scoped memory for tpu_custom_call.1']
    #allocation5 [shape = 's32[1]{0}', space=sflag, size = 0x4, scoped, tag = 'scoped memory for tpu_custom_call.1']
    #allocation6 [shape = 'u8[98304]{0}', space=vmem, size = 0x18000, scoped, tag = 'input window, operand 1, single buffered']
    #allocation7 [shape = 's32[1]{0}', space=sflag, size = 0x4, scoped, tag = 'scoped memory for tpu_custom_call.1']
    #allocation8 [shape = 'u8[4096]{0}', space=vmem, size = 0x1000, scoped, tag = 'output window, operand 0, single buffered']
    %7 = vsyncpa [#allocation4], 0
    %8 = vsyncpa [#allocation7], 0
    %9 = vsyncpa [#allocation5], 0
    // Predicated region
    $region2: #{tpu_custom_call.1} parent=1 // pred_check
      _
    $region3: #{tpu_custom_call.1} parent=1 // pred_check_branch
      %11 = sbr.rel (0) target = $region5
    $region4: #{tpu_custom_call.1} parent=1 // pred_region
      %s13 = ssub.s32 3072, 3072
      %14 = vsyncadd [#allocation4], %s13
      %s15 = sshll.u32 [#allocation3], 4
      %s16 = int_to_ptr.vmem [resolvable:$true] %s15
      %21 = dma.hbm_to_vmem [thread:$0]  %s0, 3072, %s16, [#allocation4], 1536, 1536, 96
    $region5: #{tpu_custom_call.1} parent=1 // pred_fallthru
      _
    // Predicated region
    $region6: #{tpu_custom_call.1} parent=1 // pred_check
      _
    $region7: #{tpu_custom_call.1} parent=1 // pred_check_branch
      %23 = sbr.rel (0) target = $region9
    $region8: #{tpu_custom_call.1} parent=1 // pred_region
      %s25 = ssub.s32 3072, 3072
      %26 = vsyncadd [#allocation7], %s25
      %s27 = sshll.u32 [#allocation6], 4
      %s28 = int_to_ptr.vmem [resolvable:$true] %s27
      %33 = dma.hbm_to_vmem [thread:$0]  %s1, 3072, %s28, [#allocation7], 1536, 1536, 96
    $region9: #{tpu_custom_call.1} parent=1 // pred_fallthru
      _
    // Predicated region
    $region10: #{tpu_custom_call.1} parent=1 // pred_check
      _
    $region11: #{tpu_custom_call.1} parent=1 // pred_check_branch
      %35 = sbr.rel (0) target = $region13
    $region12: #{tpu_custom_call.1} parent=1 // pred_region
      %36 = dma.done [#allocation4], 3072
    $region13: #{tpu_custom_call.1} parent=1 // pred_fallthru
      _
    // Predicated region
    $region14: #{tpu_custom_call.1} parent=1 // pred_check
      _
    $region15: #{tpu_custom_call.1} parent=1 // pred_check_branch
      %38 = sbr.rel (0) target = $region17
    $region16: #{tpu_custom_call.1} parent=1 // pred_region
      %39 = dma.done [#allocation7], 3072
    $region17: #{tpu_custom_call.1} parent=1 // pred_fallthru
      _
    %p40 = scmp.eq.s32.totalorder 0, 0
    // Predicated region
    $region18: #{tpu_custom_call.1} parent=1 // pred_check
      %p41 = pneg %p40
    $region19: #{tpu_custom_call.1} parent=1 // pred_check_branch
      %43 = sbr.rel (%p41) target = $region21
    $region20: #{tpu_custom_call.1} parent=1 // pred_region
      %44 = vst [vmem:[#allocation2] sm:$0xff] 0.0
      %45 = vst [vmem:[#allocation2 + $0x8] sm:$0xff] 0.0
      %46 = vst [vmem:[#allocation2 + $0x10] sm:$0xff] 0.0
      %47 = vst [vmem:[#allocation2 + $0x18] sm:$0xff] 0.0
      %48 = vst [vmem:[#allocation2 + $0x20] sm:$0xff] 0.0
      %49 = vst [vmem:[#allocation2 + $0x28] sm:$0xff] 0.0
      %50 = vst [vmem:[#allocation2 + $0x30] sm:$0xff] 0.0
      %51 = vst [vmem:[#allocation2 + $0x38] sm:$0xff] 0.0
      %52 = vst [vmem:[#allocation2 + $0x40] sm:$0xff] 0.0
      %53 = vst [vmem:[#allocation2 + $0x48] sm:$0xff] 0.0
      %54 = vst [vmem:[#allocation2 + $0x50] sm:$0xff] 0.0
      %55 = vst [vmem:[#allocation2 + $0x58] sm:$0xff] 0.0
    $region21: #{tpu_custom_call.1} parent=1 // pred_fallthru
      _
    %v56 = vld [vmem:[#allocation3] sm:$0xff]
    %v57 = vld [vmem:[#allocation3 + $0x8] sm:$0xff]
    %v58 = vld [vmem:[#allocation3 + $0x10] sm:$0xff]
    %v59 = vld [vmem:[#allocation3 + $0x18] sm:$0xff]
    %v60 = vld [vmem:[#allocation3 + $0x20] sm:$0xff]
    %v61 = vld [vmem:[#allocation3 + $0x28] sm:$0xff]
    %v62 = vld [vmem:[#allocation3 + $0x30] sm:$0xff]
    %v63 = vld [vmem:[#allocation3 + $0x38] sm:$0xff]
    %v64 = vld [vmem:[#allocation3 + $0x40] sm:$0xff]
    %v65 = vld [vmem:[#allocation3 + $0x48] sm:$0xff]
    %v66 = vld [vmem:[#allocation3 + $0x50] sm:$0xff]
    %v67 = vld [vmem:[#allocation3 + $0x58] sm:$0xff]
    %v68 = vld [vmem:[#allocation3 + $0x60] sm:$0x1f]
    %v69 = vld [vmem:[#allocation3 + $0x68] sm:$0x1f]
    %v70 = vld [vmem:[#allocation3 + $0x70] sm:$0x1f]
    %v71 = vld [vmem:[#allocation3 + $0x78] sm:$0x1f]
    %v72 = vld [vmem:[#allocation3 + $0x80] sm:$0x1f]
    %v73 = vld [vmem:[#allocation3 + $0x88] sm:$0x1f]
    %v74 = vld [vmem:[#allocation3 + $0x90] sm:$0x1f]
    %v75 = vld [vmem:[#allocation3 + $0x98] sm:$0x1f]
    %v76 = vld [vmem:[#allocation3 + $0xa0] sm:$0x1f]
    %v77 = vld [vmem:[#allocation3 + $0xa8] sm:$0x1f]
    %v78 = vld [vmem:[#allocation3 + $0xb0] sm:$0x1f]
    %v79 = vld [vmem:[#allocation3 + $0xb8] sm:$0x1f]
    %v80 = vld [vmem:[#allocation6] sm:$0xff]
    %v81 = vld [vmem:[#allocation6 + $0x8] sm:$0xff]
    %v82 = vld [vmem:[#allocation6 + $0x10] sm:$0xff]
    %v83 = vld [vmem:[#allocation6 + $0x18] sm:$0xff]
    %v84 = vld [vmem:[#allocation6 + $0x20] sm:$0xff]
    %v85 = vld [vmem:[#allocation6 + $0x28] sm:$0xff]
    %v86 = vld [vmem:[#allocation6 + $0x30] sm:$0xff]
    %v87 = vld [vmem:[#allocation6 + $0x38] sm:$0xff]
    %v88 = vld [vmem:[#allocation6 + $0x40] sm:$0xff]
    %v89 = vld [vmem:[#allocation6 + $0x48] sm:$0xff]
    %v90 = vld [vmem:[#allocation6 + $0x50] sm:$0xff]
    %v91 = vld [vmem:[#allocation6 + $0x58] sm:$0xff]
    %v92 = vld [vmem:[#allocation6 + $0x60] sm:$0x1f]
    %v93 = vld [vmem:[#allocation6 + $0x68] sm:$0x1f]
    %v94 = vld [vmem:[#allocation6 + $0x70] sm:$0x1f]
    %v95 = vld [vmem:[#allocation6 + $0x78] sm:$0x1f]
    %v96 = vld [vmem:[#allocation6 + $0x80] sm:$0x1f]
    %v97 = vld [vmem:[#allocation6 + $0x88] sm:$0x1f]
    %v98 = vld [vmem:[#allocation6 + $0x90] sm:$0x1f]
    %v99 = vld [vmem:[#allocation6 + $0x98] sm:$0x1f]
    %v100 = vld [vmem:[#allocation6 + $0xa0] sm:$0x1f]
    %v101 = vld [vmem:[#allocation6 + $0xa8] sm:$0x1f]
    %v102 = vld [vmem:[#allocation6 + $0xb0] sm:$0x1f]
    %v103 = vld [vmem:[#allocation6 + $0xb8] sm:$0x1f]
    %v104 = vxor.u32 %v56, 2147483648
    %v105 = vxor.u32 %v57, 2147483648
    %v106 = vxor.u32 %v58, 2147483648
    %v107 = vxor.u32 %v59, 2147483648
    %v108 = vxor.u32 %v60, 2147483648
    %v109 = vxor.u32 %v61, 2147483648
    %v110 = vxor.u32 %v62, 2147483648
    %v111 = vxor.u32 %v63, 2147483648
    %v112 = vxor.u32 %v64, 2147483648
    %v113 = vxor.u32 %v65, 2147483648
    %v114 = vxor.u32 %v66, 2147483648
    %v115 = vxor.u32 %v67, 2147483648
    %v116 = vmul.f32 %v104, 1.442695
    %v117 = vpow.pop %v116
    %v118 = vmul.f32 %v105, 1.442695
    %v119 = vpow.pop %v118
    %v120 = vmul.f32 %v106, 1.442695
    %v121 = vpow.pop %v120
    %v122 = vmul.f32 %v107, 1.442695
    %v123 = vpow.pop %v122
    %v124 = vmul.f32 %v108, 1.442695
    %v125 = vpow.pop %v124
    %v126 = vmul.f32 %v109, 1.442695
    %v127 = vpow.pop %v126
    %v128 = vmul.f32 %v110, 1.442695
    %v129 = vpow.pop %v128
    %v130 = vmul.f32 %v111, 1.442695
    %v131 = vpow.pop %v130
    %v132 = vmul.f32 %v112, 1.442695
    %v133 = vpow.pop %v132
    %v134 = vmul.f32 %v113, 1.442695
    %v135 = vpow.pop %v134
    %v136 = vmul.f32 %v114, 1.442695
    %v137 = vpow.pop %v136
    %v138 = vmul.f32 %v115, 1.442695
    %v139 = vpow.pop %v138
    %v140 = vadd.f32 %v117, 1.0
    %v141 = vadd.f32 %v119, 1.0
    %v142 = vadd.f32 %v121, 1.0
    %v143 = vadd.f32 %v123, 1.0
    %v144 = vadd.f32 %v125, 1.0
    %v145 = vadd.f32 %v127, 1.0
    %v146 = vadd.f32 %v129, 1.0
    %v147 = vadd.f32 %v131, 1.0
    %v148 = vadd.f32 %v133, 1.0
    %v149 = vadd.f32 %v135, 1.0
    %v150 = vadd.f32 %v137, 1.0
    %v151 = vadd.f32 %v139, 1.0
    %v152 = vrcp.pop %v140
    %v153 = vmul.f32 1.0, %v152
    %v154 = vrcp.pop %v141
    %v155 = vmul.f32 1.0, %v154
    %v156 = vrcp.pop %v142
    %v157 = vmul.f32 1.0, %v156
    %v158 = vrcp.pop %v143
    %v159 = vmul.f32 1.0, %v158
    %v160 = vrcp.pop %v144
    %v161 = vmul.f32 1.0, %v160
    %v162 = vrcp.pop %v145
    %v163 = vmul.f32 1.0, %v162
    %v164 = vrcp.pop %v146
    %v165 = vmul.f32 1.0, %v164
    %v166 = vrcp.pop %v147
    %v167 = vmul.f32 1.0, %v166
    %v168 = vrcp.pop %v148
    %v169 = vmul.f32 1.0, %v168
    %v170 = vrcp.pop %v149
    %v171 = vmul.f32 1.0, %v170
    %v172 = vrcp.pop %v150
    %v173 = vmul.f32 1.0, %v172
    %v174 = vrcp.pop %v151
    %v175 = vmul.f32 1.0, %v174
    %v176 = vsub.f32 %v153, %v80
    %v177 = vsub.f32 %v155, %v81
    %v178 = vsub.f32 %v157, %v82
    %v179 = vsub.f32 %v159, %v83
    %v180 = vsub.f32 %v161, %v84
    %v181 = vsub.f32 %v163, %v85
    %v182 = vsub.f32 %v165, %v86
    %v183 = vsub.f32 %v167, %v87
    %v184 = vsub.f32 %v169, %v88
    %v185 = vsub.f32 %v171, %v89
    %v186 = vsub.f32 %v173, %v90
    %v187 = vsub.f32 %v175, %v91
    %v188 = vsub.f32 %v56, %v80
    %v189 = vsub.f32 %v57, %v81
    %v190 = vsub.f32 %v58, %v82
    %v191 = vsub.f32 %v59, %v83
    %v192 = vsub.f32 %v60, %v84
    %v193 = vsub.f32 %v61, %v85
    %v194 = vsub.f32 %v62, %v86
    %v195 = vsub.f32 %v63, %v87
    %v196 = vsub.f32 %v64, %v88
    %v197 = vsub.f32 %v65, %v89
    %v198 = vsub.f32 %v66, %v90
    %v199 = vsub.f32 %v67, %v91
    %v200 = vmul.f32 %v176, %v176
    %v201 = vmul.f32 %v177, %v177
    %v202 = vmul.f32 %v178, %v178
    %v203 = vmul.f32 %v179, %v179
    %v204 = vmul.f32 %v180, %v180
    %v205 = vmul.f32 %v181, %v181
    %v206 = vmul.f32 %v182, %v182
    %v207 = vmul.f32 %v183, %v183
    %v208 = vmul.f32 %v184, %v184
    %v209 = vmul.f32 %v185, %v185
    %v210 = vmul.f32 %v186, %v186
    %v211 = vmul.f32 %v187, %v187
    %vm212 = vcmask 1041408
    %v213 = vsel %vm212, %v200, 0.0
    %v214 = vrot.slane %v213, 4
    %v215 = vadd.f32 %v213, %v214
    %v216 = vrot.slane %v215, 2
    %v217 = vadd.f32 %v215, %v216
    %v218 = vrot.slane %v217, 1
    %v219 = vadd.f32 %v217, %v218
    %v220 = vsel %vm212, %v201, 0.0
    %v221 = vrot.slane %v220, 4
    %v222 = vadd.f32 %v220, %v221
    %v223 = vrot.slane %v222, 2
    %v224 = vadd.f32 %v222, %v223
    %v225 = vrot.slane %v224, 1
    %v226 = vadd.f32 %v224, %v225
    %v227 = vsel %vm212, %v202, 0.0
    %v228 = vrot.slane %v227, 4
    %v229 = vadd.f32 %v227, %v228
    %v230 = vrot.slane %v229, 2
    %v231 = vadd.f32 %v229, %v230
    %v232 = vrot.slane %v231, 1
    %v233 = vadd.f32 %v231, %v232
    %v234 = vsel %vm212, %v203, 0.0
    %v235 = vrot.slane %v234, 4
    %v236 = vadd.f32 %v234, %v235
    %v237 = vrot.slane %v236, 2
    %v238 = vadd.f32 %v236, %v237
    %v239 = vrot.slane %v238, 1
    %v240 = vadd.f32 %v238, %v239
    %v241 = vsel %vm212, %v204, 0.0
    %v242 = vrot.slane %v241, 4
    %v243 = vadd.f32 %v241, %v242
    %v244 = vrot.slane %v243, 2
    %v245 = vadd.f32 %v243, %v244
    %v246 = vrot.slane %v245, 1
    %v247 = vadd.f32 %v245, %v246
    %v248 = vsel %vm212, %v205, 0.0
    %v249 = vrot.slane %v248, 4
    %v250 = vadd.f32 %v248, %v249
    %v251 = vrot.slane %v250, 2
    %v252 = vadd.f32 %v250, %v251
    %v253 = vrot.slane %v252, 1
    %v254 = vadd.f32 %v252, %v253
    %v255 = vsel %vm212, %v206, 0.0
    %v256 = vrot.slane %v255, 4
    %v257 = vadd.f32 %v255, %v256
    %v258 = vrot.slane %v257, 2
    %v259 = vadd.f32 %v257, %v258
    %v260 = vrot.slane %v259, 1
    %v261 = vadd.f32 %v259, %v260
    %v262 = vsel %vm212, %v207, 0.0
    %v263 = vrot.slane %v262, 4
    %v264 = vadd.f32 %v262, %v263
    %v265 = vrot.slane %v264, 2
    %v266 = vadd.f32 %v264, %v265
    %v267 = vrot.slane %v266, 1
    %v268 = vadd.f32 %v266, %v267
    %v269 = vsel %vm212, %v208, 0.0
    %v270 = vrot.slane %v269, 4
    %v271 = vadd.f32 %v269, %v270
    %v272 = vrot.slane %v271, 2
    %v273 = vadd.f32 %v271, %v272
    %v274 = vrot.slane %v273, 1
    %v275 = vadd.f32 %v273, %v274
    %v276 = vsel %vm212, %v209, 0.0
    %v277 = vrot.slane %v276, 4
    %v278 = vadd.f32 %v276, %v277
    %v279 = vrot.slane %v278, 2
    %v280 = vadd.f32 %v278, %v279
    %v281 = vrot.slane %v280, 1
    %v282 = vadd.f32 %v280, %v281
    %v283 = vsel %vm212, %v210, 0.0
    %v284 = vrot.slane %v283, 4
    %v285 = vadd.f32 %v283, %v284
    %v286 = vrot.slane %v285, 2
    %v287 = vadd.f32 %v285, %v286
    %v288 = vrot.slane %v287, 1
    %v289 = vadd.f32 %v287, %v288
    %v290 = vsel %vm212, %v211, 0.0
    %v291 = vrot.slane %v290, 4
    %v292 = vadd.f32 %v290, %v291
    %v293 = vrot.slane %v292, 2
    %v294 = vadd.f32 %v292, %v293
    %v295 = vrot.slane %v294, 1
    %v296 = vadd.f32 %v294, %v295
    %v297 = vmul.f32 %v188, %v188
    %v298 = vmul.f32 %v189, %v189
    %v299 = vmul.f32 %v190, %v190
    %v300 = vmul.f32 %v191, %v191
    %v301 = vmul.f32 %v192, %v192
    %v302 = vmul.f32 %v193, %v193
    %v303 = vmul.f32 %v194, %v194
    %v304 = vmul.f32 %v195, %v195
    %v305 = vmul.f32 %v196, %v196
    %v306 = vmul.f32 %v197, %v197
    %v307 = vmul.f32 %v198, %v198
    %v308 = vmul.f32 %v199, %v199
    %v321 = vrot.slane %v297, 2
    %v322 = vrot.slane %v298, 2
    %v323 = vrot.slane %v299, 2
    %v324 = vrot.slane %v300, 2
    %v325 = vrot.slane %v301, 2
    %v326 = vrot.slane %v302, 2
    %v327 = vrot.slane %v303, 2
    %v328 = vrot.slane %v304, 2
    %v329 = vrot.slane %v305, 2
    %v330 = vrot.slane %v306, 2
    %v331 = vrot.slane %v307, 2
    %v332 = vrot.slane %v308, 2
    %v345 = vsel %vm212, %v321, 0.0
    %v346 = vrot.slane %v345, 4
    %v347 = vadd.f32 %v345, %v346
    %v348 = vrot.slane %v347, 2
    %v349 = vadd.f32 %v347, %v348
    %v350 = vrot.slane %v349, 1
    %v351 = vadd.f32 %v349, %v350
    %v352 = vsel %vm212, %v322, 0.0
    %v353 = vrot.slane %v352, 4
    %v354 = vadd.f32 %v352, %v353
    %v355 = vrot.slane %v354, 2
    %v356 = vadd.f32 %v354, %v355
    %v357 = vrot.slane %v356, 1
    %v358 = vadd.f32 %v356, %v357
    %v359 = vsel %vm212, %v323, 0.0
    %v360 = vrot.slane %v359, 4
    %v361 = vadd.f32 %v359, %v360
    %v362 = vrot.slane %v361, 2
    %v363 = vadd.f32 %v361, %v362
    %v364 = vrot.slane %v363, 1
    %v365 = vadd.f32 %v363, %v364
    %v366 = vsel %vm212, %v324, 0.0
    %v367 = vrot.slane %v366, 4
    %v368 = vadd.f32 %v366, %v367
    %v369 = vrot.slane %v368, 2
    %v370 = vadd.f32 %v368, %v369
    %v371 = vrot.slane %v370, 1
    %v372 = vadd.f32 %v370, %v371
    %v373 = vsel %vm212, %v325, 0.0
    %v374 = vrot.slane %v373, 4
    %v375 = vadd.f32 %v373, %v374
    %v376 = vrot.slane %v375, 2
    %v377 = vadd.f32 %v375, %v376
    %v378 = vrot.slane %v377, 1
    %v379 = vadd.f32 %v377, %v378
    %v380 = vsel %vm212, %v326, 0.0
    %v381 = vrot.slane %v380, 4
    %v382 = vadd.f32 %v380, %v381
    %v383 = vrot.slane %v382, 2
    %v384 = vadd.f32 %v382, %v383
    %v385 = vrot.slane %v384, 1
    %v386 = vadd.f32 %v384, %v385
    %v387 = vsel %vm212, %v327, 0.0
    %v388 = vrot.slane %v387, 4
    %v389 = vadd.f32 %v387, %v388
    %v390 = vrot.slane %v389, 2
    %v391 = vadd.f32 %v389, %v390
    %v392 = vrot.slane %v391, 1
    %v393 = vadd.f32 %v391, %v392
    %v394 = vsel %vm212, %v328, 0.0
    %v395 = vrot.slane %v394, 4
    %v396 = vadd.f32 %v394, %v395
    %v397 = vrot.slane %v396, 2
    %v398 = vadd.f32 %v396, %v397
    %v399 = vrot.slane %v398, 1
    %v400 = vadd.f32 %v398, %v399
    %v401 = vsel %vm212, %v329, 0.0
    %v402 = vrot.slane %v401, 4
    %v403 = vadd.f32 %v401, %v402
    %v404 = vrot.slane %v403, 2
    %v405 = vadd.f32 %v403, %v404
    %v406 = vrot.slane %v405, 1
    %v407 = vadd.f32 %v405, %v406
    %v408 = vsel %vm212, %v330, 0.0
    %v409 = vrot.slane %v408, 4
    %v410 = vadd.f32 %v408, %v409
    %v411 = vrot.slane %v410, 2
    %v412 = vadd.f32 %v410, %v411
    %v413 = vrot.slane %v412, 1
    %v414 = vadd.f32 %v412, %v413
    %v415 = vsel %vm212, %v331, 0.0
    %v416 = vrot.slane %v415, 4
    %v417 = vadd.f32 %v415, %v416
    %v418 = vrot.slane %v417, 2
    %v419 = vadd.f32 %v417, %v418
    %v420 = vrot.slane %v419, 1
    %v421 = vadd.f32 %v419, %v420
    %v422 = vsel %vm212, %v332, 0.0
    %v423 = vrot.slane %v422, 4
    %v424 = vadd.f32 %v422, %v423
    %v425 = vrot.slane %v424, 2
    %v426 = vadd.f32 %v424, %v425
    %v427 = vrot.slane %v426, 1
    %v428 = vadd.f32 %v426, %v427
    %v429 = vmax.f32 %v56, 0.0
    %v430 = vmax.f32 %v57, 0.0
    %v431 = vmax.f32 %v58, 0.0
    %v432 = vmax.f32 %v59, 0.0
    %v433 = vmax.f32 %v60, 0.0
    %v434 = vmax.f32 %v61, 0.0
    %v435 = vmax.f32 %v62, 0.0
    %v436 = vmax.f32 %v63, 0.0
    %v437 = vmax.f32 %v64, 0.0
    %v438 = vmax.f32 %v65, 0.0
    %v439 = vmax.f32 %v66, 0.0
    %v440 = vmax.f32 %v67, 0.0
    %v441 = vmax.f32 %v68, 0.0
    %v442 = vmax.f32 %v69, 0.0
    %v443 = vmax.f32 %v70, 0.0
    %v444 = vmax.f32 %v71, 0.0
    %v445 = vmax.f32 %v72, 0.0
    %v446 = vmax.f32 %v73, 0.0
    %v447 = vmax.f32 %v74, 0.0
    %v448 = vmax.f32 %v75, 0.0
    %v449 = vmax.f32 %v76, 0.0
    %v450 = vmax.f32 %v77, 0.0
    %v451 = vmax.f32 %v78, 0.0
    %v452 = vmax.f32 %v79, 0.0
    %v453 = vmul.f32 %v56, %v80
    %v454 = vmul.f32 %v57, %v81
    %v455 = vmul.f32 %v58, %v82
    %v456 = vmul.f32 %v59, %v83
    %v457 = vmul.f32 %v60, %v84
    %v458 = vmul.f32 %v61, %v85
    %v459 = vmul.f32 %v62, %v86
    %v460 = vmul.f32 %v63, %v87
    %v461 = vmul.f32 %v64, %v88
    %v462 = vmul.f32 %v65, %v89
    %v463 = vmul.f32 %v66, %v90
    %v464 = vmul.f32 %v67, %v91
    %v465 = vmul.f32 %v68, %v92
    %v466 = vmul.f32 %v69, %v93
    %v467 = vmul.f32 %v70, %v94
    %v468 = vmul.f32 %v71, %v95
    %v469 = vmul.f32 %v72, %v96
    %v470 = vmul.f32 %v73, %v97
    %v471 = vmul.f32 %v74, %v98
    %v472 = vmul.f32 %v75, %v99
    %v473 = vmul.f32 %v76, %v100
    %v474 = vmul.f32 %v77, %v101
    %v475 = vmul.f32 %v78, %v102
    %v476 = vmul.f32 %v79, %v103
    %v477 = vsub.f32 %v429, %v453
    %v478 = vsub.f32 %v430, %v454
    %v479 = vsub.f32 %v431, %v455
    %v480 = vsub.f32 %v432, %v456
    %v481 = vsub.f32 %v433, %v457
    %v482 = vsub.f32 %v434, %v458
    %v483 = vsub.f32 %v435, %v459
    %v484 = vsub.f32 %v436, %v460
    %v485 = vsub.f32 %v437, %v461
    %v486 = vsub.f32 %v438, %v462
    %v487 = vsub.f32 %v439, %v463
    %v488 = vsub.f32 %v440, %v464
    %v489 = vsub.f32 %v441, %v465
    %v490 = vsub.f32 %v442, %v466
    %v491 = vsub.f32 %v443, %v467
    %v492 = vsub.f32 %v444, %v468
    %v493 = vsub.f32 %v445, %v469
    %v494 = vsub.f32 %v446, %v470
    %v495 = vsub.f32 %v447, %v471
    %v496 = vsub.f32 %v448, %v472
    %v497 = vsub.f32 %v449, %v473
    %v498 = vsub.f32 %v450, %v474
    %v499 = vsub.f32 %v451, %v475
    %v500 = vsub.f32 %v452, %v476
    %v501 = vand.u32 2147483647, %v56
    %v502 = vand.u32 2147483647, %v57
    %v503 = vand.u32 2147483647, %v58
    %v504 = vand.u32 2147483647, %v59
    %v505 = vand.u32 2147483647, %v60
    %v506 = vand.u32 2147483647, %v61
    %v507 = vand.u32 2147483647, %v62
    %v508 = vand.u32 2147483647, %v63
    %v509 = vand.u32 2147483647, %v64
    %v510 = vand.u32 2147483647, %v65
    %v511 = vand.u32 2147483647, %v66
    %v512 = vand.u32 2147483647, %v67
    %v513 = vand.u32 2147483647, %v68
    %v514 = vand.u32 2147483647, %v69
    %v515 = vand.u32 2147483647, %v70
    %v516 = vand.u32 2147483647, %v71
    %v517 = vand.u32 2147483647, %v72
    %v518 = vand.u32 2147483647, %v73
    %v519 = vand.u32 2147483647, %v74
    %v520 = vand.u32 2147483647, %v75
    %v521 = vand.u32 2147483647, %v76
    %v522 = vand.u32 2147483647, %v77
    %v523 = vand.u32 2147483647, %v78
    %v524 = vand.u32 2147483647, %v79
    %v525 = vsub.f32 0.0, %v501
    %v526 = vsub.f32 0.0, %v502
    %v527 = vsub.f32 0.0, %v503
    %v528 = vsub.f32 0.0, %v504
    %v529 = vsub.f32 0.0, %v505
    %v530 = vsub.f32 0.0, %v506
    %v531 = vsub.f32 0.0, %v507
    %v532 = vsub.f32 0.0, %v508
    %v533 = vsub.f32 0.0, %v509
    %v534 = vsub.f32 0.0, %v510
    %v535 = vsub.f32 0.0, %v511
    %v536 = vsub.f32 0.0, %v512
    %v537 = vsub.f32 0.0, %v513
    %v538 = vsub.f32 0.0, %v514
    %v539 = vsub.f32 0.0, %v515
    %v540 = vsub.f32 0.0, %v516
    %v541 = vsub.f32 0.0, %v517
    %v542 = vsub.f32 0.0, %v518
    %v543 = vsub.f32 0.0, %v519
    %v544 = vsub.f32 0.0, %v520
    %v545 = vsub.f32 0.0, %v521
    %v546 = vsub.f32 0.0, %v522
    %v547 = vsub.f32 0.0, %v523
    %v548 = vsub.f32 0.0, %v524
    %v549 = vmul.f32 %v525, 1.442695
    %v550 = vpow.pop %v549
    %v551 = vmul.f32 %v526, 1.442695
    %v552 = vpow.pop %v551
    %v553 = vmul.f32 %v527, 1.442695
    %v554 = vpow.pop %v553
    %v555 = vmul.f32 %v528, 1.442695
    %v556 = vpow.pop %v555
    %v557 = vmul.f32 %v529, 1.442695
    %v558 = vpow.pop %v557
    %v559 = vmul.f32 %v530, 1.442695
    %v560 = vpow.pop %v559
    %v561 = vmul.f32 %v531, 1.442695
    %v562 = vpow.pop %v561
    %v563 = vmul.f32 %v532, 1.442695
    %v564 = vpow.pop %v563
    %v565 = vmul.f32 %v533, 1.442695
    %v566 = vpow.pop %v565
    %v567 = vmul.f32 %v534, 1.442695
    %v568 = vpow.pop %v567
    %v569 = vmul.f32 %v535, 1.442695
    %v570 = vpow.pop %v569
    %v571 = vmul.f32 %v536, 1.442695
    %v572 = vpow.pop %v571
    %v573 = vmul.f32 %v537, 1.442695
    %v574 = vpow.pop %v573
    %v575 = vmul.f32 %v538, 1.442695
    %v576 = vpow.pop %v575
    %v577 = vmul.f32 %v539, 1.442695
    %v578 = vpow.pop %v577
    %v579 = vmul.f32 %v540, 1.442695
    %v580 = vpow.pop %v579
    %v581 = vmul.f32 %v541, 1.442695
    %v582 = vpow.pop %v581
    %v583 = vmul.f32 %v542, 1.442695
    %v584 = vpow.pop %v583
    %v585 = vmul.f32 %v543, 1.442695
    %v586 = vpow.pop %v585
    %v587 = vmul.f32 %v544, 1.442695
    %v588 = vpow.pop %v587
    %v589 = vmul.f32 %v545, 1.442695
    %v590 = vpow.pop %v589
    %v591 = vmul.f32 %v546, 1.442695
    %v592 = vpow.pop %v591
    %v593 = vmul.f32 %v547, 1.442695
    %v594 = vpow.pop %v593
    %v595 = vmul.f32 %v548, 1.442695
    %v596 = vpow.pop %v595
    %v597 = vadd.f32 %v550, 1.0
    %v598 = vlog2.pop %v597
    %v599 = vmul.f32 %v598, 0.6931472
    %v600 = vmul.f32 -0.5, %v550
    %v601 = vadd.f32 %v600, 1.0
    %v602 = vmul.f32 %v601, %v550
    %v603 = vand.u32 2147483647, %v550
    %vm604 = vcmp.lt.f32.partialorder %v603, 0.0004427343
    %v605 = vsel %vm604, %v602, %v599
    %v606 = vadd.f32 %v552, 1.0
    %v607 = vlog2.pop %v606
    %v608 = vmul.f32 %v607, 0.6931472
    %v609 = vmul.f32 -0.5, %v552
    %v610 = vadd.f32 %v609, 1.0
    %v611 = vmul.f32 %v610, %v552
    %v612 = vand.u32 2147483647, %v552
    %vm613 = vcmp.lt.f32.partialorder %v612, 0.0004427343
    %v614 = vsel %vm613, %v611, %v608
    %v615 = vadd.f32 %v554, 1.0
    %v616 = vlog2.pop %v615
    %v617 = vmul.f32 %v616, 0.6931472
    %v618 = vmul.f32 -0.5, %v554
    %v619 = vadd.f32 %v618, 1.0
    %v620 = vmul.f32 %v619, %v554
    %v621 = vand.u32 2147483647, %v554
    %vm622 = vcmp.lt.f32.partialorder %v621, 0.0004427343
    %v623 = vsel %vm622, %v620, %v617
    %v624 = vadd.f32 %v556, 1.0
    %v625 = vlog2.pop %v624
    %v626 = vmul.f32 %v625, 0.6931472
    %v627 = vmul.f32 -0.5, %v556
    %v628 = vadd.f32 %v627, 1.0
    %v629 = vmul.f32 %v628, %v556
    %v630 = vand.u32 2147483647, %v556
    %vm631 = vcmp.lt.f32.partialorder %v630, 0.0004427343
    %v632 = vsel %vm631, %v629, %v626
    %v633 = vadd.f32 %v558, 1.0
    %v634 = vlog2.pop %v633
    %v635 = vmul.f32 %v634, 0.6931472
    %v636 = vmul.f32 -0.5, %v558
    %v637 = vadd.f32 %v636, 1.0
    %v638 = vmul.f32 %v637, %v558
    %v639 = vand.u32 2147483647, %v558
    %vm640 = vcmp.lt.f32.partialorder %v639, 0.0004427343
    %v641 = vsel %vm640, %v638, %v635
    %v642 = vadd.f32 %v560, 1.0
    %v643 = vlog2.pop %v642
    %v644 = vmul.f32 %v643, 0.6931472
    %v645 = vmul.f32 -0.5, %v560
    %v646 = vadd.f32 %v645, 1.0
    %v647 = vmul.f32 %v646, %v560
    %v648 = vand.u32 2147483647, %v560
    %vm649 = vcmp.lt.f32.partialorder %v648, 0.0004427343
    %v650 = vsel %vm649, %v647, %v644
    %v651 = vadd.f32 %v562, 1.0
    %v652 = vlog2.pop %v651
    %v653 = vmul.f32 %v652, 0.6931472
    %v654 = vmul.f32 -0.5, %v562
    %v655 = vadd.f32 %v654, 1.0
    %v656 = vmul.f32 %v655, %v562
    %v657 = vand.u32 2147483647, %v562
    %vm658 = vcmp.lt.f32.partialorder %v657, 0.0004427343
    %v659 = vsel %vm658, %v656, %v653
    %v660 = vadd.f32 %v564, 1.0
    %v661 = vlog2.pop %v660
    %v662 = vmul.f32 %v661, 0.6931472
    %v663 = vmul.f32 -0.5, %v564
    %v664 = vadd.f32 %v663, 1.0
    %v665 = vmul.f32 %v664, %v564
    %v666 = vand.u32 2147483647, %v564
    %vm667 = vcmp.lt.f32.partialorder %v666, 0.0004427343
    %v668 = vsel %vm667, %v665, %v662
    %v669 = vadd.f32 %v566, 1.0
    %v670 = vlog2.pop %v669
    %v671 = vmul.f32 %v670, 0.6931472
    %v672 = vmul.f32 -0.5, %v566
    %v673 = vadd.f32 %v672, 1.0
    %v674 = vmul.f32 %v673, %v566
    %v675 = vand.u32 2147483647, %v566
    %vm676 = vcmp.lt.f32.partialorder %v675, 0.0004427343
    %v677 = vsel %vm676, %v674, %v671
    %v678 = vadd.f32 %v568, 1.0
    %v679 = vlog2.pop %v678
    %v680 = vmul.f32 %v679, 0.6931472
    %v681 = vmul.f32 -0.5, %v568
    %v682 = vadd.f32 %v681, 1.0
    %v683 = vmul.f32 %v682, %v568
    %v684 = vand.u32 2147483647, %v568
    %vm685 = vcmp.lt.f32.partialorder %v684, 0.0004427343
    %v686 = vsel %vm685, %v683, %v680
    %v687 = vadd.f32 %v570, 1.0
    %v688 = vlog2.pop %v687
    %v689 = vmul.f32 %v688, 0.6931472
    %v690 = vmul.f32 -0.5, %v570
    %v691 = vadd.f32 %v690, 1.0
    %v692 = vmul.f32 %v691, %v570
    %v693 = vand.u32 2147483647, %v570
    %vm694 = vcmp.lt.f32.partialorder %v693, 0.0004427343
    %v695 = vsel %vm694, %v692, %v689
    %v696 = vadd.f32 %v572, 1.0
    %v697 = vlog2.pop %v696
    %v698 = vmul.f32 %v697, 0.6931472
    %v699 = vmul.f32 -0.5, %v572
    %v700 = vadd.f32 %v699, 1.0
    %v701 = vmul.f32 %v700, %v572
    %v702 = vand.u32 2147483647, %v572
    %vm703 = vcmp.lt.f32.partialorder %v702, 0.0004427343
    %v704 = vsel %vm703, %v701, %v698
    %v705 = vadd.f32 %v574, 1.0
    %v706 = vlog2.pop %v705
    %v707 = vmul.f32 %v706, 0.6931472
    %v708 = vmul.f32 -0.5, %v574
    %v709 = vadd.f32 %v708, 1.0
    %v710 = vmul.f32 %v709, %v574
    %v711 = vand.u32 2147483647, %v574
    %vm712 = vcmp.lt.f32.partialorder %v711, 0.0004427343
    %v713 = vsel %vm712, %v710, %v707
    %v714 = vadd.f32 %v576, 1.0
    %v715 = vlog2.pop %v714
    %v716 = vmul.f32 %v715, 0.6931472
    %v717 = vmul.f32 -0.5, %v576
    %v718 = vadd.f32 %v717, 1.0
    %v719 = vmul.f32 %v718, %v576
    %v720 = vand.u32 2147483647, %v576
    %vm721 = vcmp.lt.f32.partialorder %v720, 0.0004427343
    %v722 = vsel %vm721, %v719, %v716
    %v723 = vadd.f32 %v578, 1.0
    %v724 = vlog2.pop %v723
    %v725 = vmul.f32 %v724, 0.6931472
    %v726 = vmul.f32 -0.5, %v578
    %v727 = vadd.f32 %v726, 1.0
    %v728 = vmul.f32 %v727, %v578
    %v729 = vand.u32 2147483647, %v578
    %vm730 = vcmp.lt.f32.partialorder %v729, 0.0004427343
    %v731 = vsel %vm730, %v728, %v725
    %v732 = vadd.f32 %v580, 1.0
    %v733 = vlog2.pop %v732
    %v734 = vmul.f32 %v733, 0.6931472
    %v735 = vmul.f32 -0.5, %v580
    %v736 = vadd.f32 %v735, 1.0
    %v737 = vmul.f32 %v736, %v580
    %v738 = vand.u32 2147483647, %v580
    %vm739 = vcmp.lt.f32.partialorder %v738, 0.0004427343
    %v740 = vsel %vm739, %v737, %v734
    %v741 = vadd.f32 %v582, 1.0
    %v742 = vlog2.pop %v741
    %v743 = vmul.f32 %v742, 0.6931472
    %v744 = vmul.f32 -0.5, %v582
    %v745 = vadd.f32 %v744, 1.0
    %v746 = vmul.f32 %v745, %v582
    %v747 = vand.u32 2147483647, %v582
    %vm748 = vcmp.lt.f32.partialorder %v747, 0.0004427343
    %v749 = vsel %vm748, %v746, %v743
    %v750 = vadd.f32 %v584, 1.0
    %v751 = vlog2.pop %v750
    %v752 = vmul.f32 %v751, 0.6931472
    %v753 = vmul.f32 -0.5, %v584
    %v754 = vadd.f32 %v753, 1.0
    %v755 = vmul.f32 %v754, %v584
    %v756 = vand.u32 2147483647, %v584
    %vm757 = vcmp.lt.f32.partialorder %v756, 0.0004427343
    %v758 = vsel %vm757, %v755, %v752
    %v759 = vadd.f32 %v586, 1.0
    %v760 = vlog2.pop %v759
    %v761 = vmul.f32 %v760, 0.6931472
    %v762 = vmul.f32 -0.5, %v586
    %v763 = vadd.f32 %v762, 1.0
    %v764 = vmul.f32 %v763, %v586
    %v765 = vand.u32 2147483647, %v586
    %vm766 = vcmp.lt.f32.partialorder %v765, 0.0004427343
    %v767 = vsel %vm766, %v764, %v761
    %v768 = vadd.f32 %v588, 1.0
    %v769 = vlog2.pop %v768
    %v770 = vmul.f32 %v769, 0.6931472
    %v771 = vmul.f32 -0.5, %v588
    %v772 = vadd.f32 %v771, 1.0
    %v773 = vmul.f32 %v772, %v588
    %v774 = vand.u32 2147483647, %v588
    %vm775 = vcmp.lt.f32.partialorder %v774, 0.0004427343
    %v776 = vsel %vm775, %v773, %v770
    %v777 = vadd.f32 %v590, 1.0
    %v778 = vlog2.pop %v777
    %v779 = vmul.f32 %v778, 0.6931472
    %v780 = vmul.f32 -0.5, %v590
    %v781 = vadd.f32 %v780, 1.0
    %v782 = vmul.f32 %v781, %v590
    %v783 = vand.u32 2147483647, %v590
    %vm784 = vcmp.lt.f32.partialorder %v783, 0.0004427343
    %v785 = vsel %vm784, %v782, %v779
    %v786 = vadd.f32 %v592, 1.0
    %v787 = vlog2.pop %v786
    %v788 = vmul.f32 %v787, 0.6931472
    %v789 = vmul.f32 -0.5, %v592
    %v790 = vadd.f32 %v789, 1.0
    %v791 = vmul.f32 %v790, %v592
    %v792 = vand.u32 2147483647, %v592
    %vm793 = vcmp.lt.f32.partialorder %v792, 0.0004427343
    %v794 = vsel %vm793, %v791, %v788
    %v795 = vadd.f32 %v594, 1.0
    %v796 = vlog2.pop %v795
    %v797 = vmul.f32 %v796, 0.6931472
    %v798 = vmul.f32 -0.5, %v594
    %v799 = vadd.f32 %v798, 1.0
    %v800 = vmul.f32 %v799, %v594
    %v801 = vand.u32 2147483647, %v594
    %vm802 = vcmp.lt.f32.partialorder %v801, 0.0004427343
    %v803 = vsel %vm802, %v800, %v797
    %v804 = vadd.f32 %v596, 1.0
    %v805 = vlog2.pop %v804
    %v806 = vmul.f32 %v805, 0.6931472
    %v807 = vmul.f32 -0.5, %v596
    %v808 = vadd.f32 %v807, 1.0
    %v809 = vmul.f32 %v808, %v596
    %v810 = vand.u32 2147483647, %v596
    %vm811 = vcmp.lt.f32.partialorder %v810, 0.0004427343
    %v812 = vsel %vm811, %v809, %v806
    %v813 = vadd.f32 %v477, %v605
    %v814 = vadd.f32 %v478, %v614
    %v815 = vadd.f32 %v479, %v623
    %v816 = vadd.f32 %v480, %v632
    %v817 = vadd.f32 %v481, %v641
    %v818 = vadd.f32 %v482, %v650
    %v819 = vadd.f32 %v483, %v659
    %v820 = vadd.f32 %v484, %v668
    %v821 = vadd.f32 %v485, %v677
    %v822 = vadd.f32 %v486, %v686
    %v823 = vadd.f32 %v487, %v695
    %v824 = vadd.f32 %v488, %v704
    %v825 = vadd.f32 %v489, %v713
    %v826 = vadd.f32 %v490, %v722
    %v827 = vadd.f32 %v491, %v731
    %v828 = vadd.f32 %v492, %v740
    %v829 = vadd.f32 %v493, %v749
    %v830 = vadd.f32 %v494, %v758
    %v831 = vadd.f32 %v495, %v767
    %v832 = vadd.f32 %v496, %v776
    %v833 = vadd.f32 %v497, %v785
    %v834 = vadd.f32 %v498, %v794
    %v835 = vadd.f32 %v499, %v803
    %v836 = vadd.f32 %v500, %v812
    %vm861 = vcmask 1042432
    %v862 = vrot.slane %v813, 5
    %v863 = vrot.slane %v825, 5
    %v864 = vsel %vm861, %v862, %v863
    %v865 = vrot.slane %v814, 5
    %v866 = vrot.slane %v826, 5
    %v867 = vsel %vm861, %v865, %v866
    %v868 = vrot.slane %v815, 5
    %v869 = vrot.slane %v827, 5
    %v870 = vsel %vm861, %v868, %v869
    %v871 = vrot.slane %v816, 5
    %v872 = vrot.slane %v828, 5
    %v873 = vsel %vm861, %v871, %v872
    %v874 = vrot.slane %v817, 5
    %v875 = vrot.slane %v829, 5
    %v876 = vsel %vm861, %v874, %v875
    %v877 = vrot.slane %v818, 5
    %v878 = vrot.slane %v830, 5
    %v879 = vsel %vm861, %v877, %v878
    %v880 = vrot.slane %v819, 5
    %v881 = vrot.slane %v831, 5
    %v882 = vsel %vm861, %v880, %v881
    %v883 = vrot.slane %v820, 5
    %v884 = vrot.slane %v832, 5
    %v885 = vsel %vm861, %v883, %v884
    %v886 = vrot.slane %v821, 5
    %v887 = vrot.slane %v833, 5
    %v888 = vsel %vm861, %v886, %v887
    %v889 = vrot.slane %v822, 5
    %v890 = vrot.slane %v834, 5
    %v891 = vsel %vm861, %v889, %v890
    %v892 = vrot.slane %v823, 5
    %v893 = vrot.slane %v835, 5
    %v894 = vsel %vm861, %v892, %v893
    %v895 = vrot.slane %v824, 5
    %v896 = vrot.slane %v836, 5
    %v897 = vsel %vm861, %v895, %v896
    %v910 = vrot.slane %v864, 4
    %v911 = vadd.f32 %v864, %v910
    %v912 = vrot.slane %v911, 2
    %v913 = vadd.f32 %v911, %v912
    %v914 = vrot.slane %v913, 1
    %v915 = vadd.f32 %v913, %v914
    %v916 = vrot.slane %v867, 4
    %v917 = vadd.f32 %v867, %v916
    %v918 = vrot.slane %v917, 2
    %v919 = vadd.f32 %v917, %v918
    %v920 = vrot.slane %v919, 1
    %v921 = vadd.f32 %v919, %v920
    %v922 = vrot.slane %v870, 4
    %v923 = vadd.f32 %v870, %v922
    %v924 = vrot.slane %v923, 2
    %v925 = vadd.f32 %v923, %v924
    %v926 = vrot.slane %v925, 1
    %v927 = vadd.f32 %v925, %v926
    %v928 = vrot.slane %v873, 4
    %v929 = vadd.f32 %v873, %v928
    %v930 = vrot.slane %v929, 2
    %v931 = vadd.f32 %v929, %v930
    %v932 = vrot.slane %v931, 1
    %v933 = vadd.f32 %v931, %v932
    %v934 = vrot.slane %v876, 4
    %v935 = vadd.f32 %v876, %v934
    %v936 = vrot.slane %v935, 2
    %v937 = vadd.f32 %v935, %v936
    %v938 = vrot.slane %v937, 1
    %v939 = vadd.f32 %v937, %v938
    %v940 = vrot.slane %v879, 4
    %v941 = vadd.f32 %v879, %v940
    %v942 = vrot.slane %v941, 2
    %v943 = vadd.f32 %v941, %v942
    %v944 = vrot.slane %v943, 1
    %v945 = vadd.f32 %v943, %v944
    %v946 = vrot.slane %v882, 4
    %v947 = vadd.f32 %v882, %v946
    %v948 = vrot.slane %v947, 2
    %v949 = vadd.f32 %v947, %v948
    %v950 = vrot.slane %v949, 1
    %v951 = vadd.f32 %v949, %v950
    %v952 = vrot.slane %v885, 4
    %v953 = vadd.f32 %v885, %v952
    %v954 = vrot.slane %v953, 2
    %v955 = vadd.f32 %v953, %v954
    %v956 = vrot.slane %v955, 1
    %v957 = vadd.f32 %v955, %v956
    %v958 = vrot.slane %v888, 4
    %v959 = vadd.f32 %v888, %v958
    %v960 = vrot.slane %v959, 2
    %v961 = vadd.f32 %v959, %v960
    %v962 = vrot.slane %v961, 1
    %v963 = vadd.f32 %v961, %v962
    %v964 = vrot.slane %v891, 4
    %v965 = vadd.f32 %v891, %v964
    %v966 = vrot.slane %v965, 2
    %v967 = vadd.f32 %v965, %v966
    %v968 = vrot.slane %v967, 1
    %v969 = vadd.f32 %v967, %v968
    %v970 = vrot.slane %v894, 4
    %v971 = vadd.f32 %v894, %v970
    %v972 = vrot.slane %v971, 2
    %v973 = vadd.f32 %v971, %v972
    %v974 = vrot.slane %v973, 1
    %v975 = vadd.f32 %v973, %v974
    %v976 = vrot.slane %v897, 4
    %v977 = vadd.f32 %v897, %v976
    %v978 = vrot.slane %v977, 2
    %v979 = vadd.f32 %v977, %v978
    %v980 = vrot.slane %v979, 1
    %v981 = vadd.f32 %v979, %v980
    %v982 = vmul.f32 %v80, %v219
    %v983 = vmul.f32 %v81, %v226
    %v984 = vmul.f32 %v82, %v233
    %v985 = vmul.f32 %v83, %v240
    %v986 = vmul.f32 %v84, %v247
    %v987 = vmul.f32 %v85, %v254
    %v988 = vmul.f32 %v86, %v261
    %v989 = vmul.f32 %v87, %v268
    %v990 = vmul.f32 %v88, %v275
    %v991 = vmul.f32 %v89, %v282
    %v992 = vmul.f32 %v90, %v289
    %v993 = vmul.f32 %v91, %v296
    %v994 = vmul.f32 %v80, %v351
    %v995 = vmul.f32 %v81, %v358
    %v996 = vmul.f32 %v82, %v365
    %v997 = vmul.f32 %v83, %v372
    %v998 = vmul.f32 %v84, %v379
    %v999 = vmul.f32 %v85, %v386
    %v1000 = vmul.f32 %v86, %v393
    %v1001 = vmul.f32 %v87, %v400
    %v1002 = vmul.f32 %v88, %v407
    %v1003 = vmul.f32 %v89, %v414
    %v1004 = vmul.f32 %v90, %v421
    %v1005 = vmul.f32 %v91, %v428
    %v1006 = vmul.f32 %v80, %v813
    %v1007 = vmul.f32 %v81, %v814
    %v1008 = vmul.f32 %v82, %v815
    %v1009 = vmul.f32 %v83, %v816
    %v1010 = vmul.f32 %v84, %v817
    %v1011 = vmul.f32 %v85, %v818
    %v1012 = vmul.f32 %v86, %v819
    %v1013 = vmul.f32 %v87, %v820
    %v1014 = vmul.f32 %v88, %v821
    %v1015 = vmul.f32 %v89, %v822
    %v1016 = vmul.f32 %v90, %v823
    %v1017 = vmul.f32 %v91, %v824
    %v1018 = vsub.f32 %v813, %v1006
    %v1019 = vsub.f32 %v814, %v1007
    %v1020 = vsub.f32 %v815, %v1008
    %v1021 = vsub.f32 %v816, %v1009
    %v1022 = vsub.f32 %v817, %v1010
    %v1023 = vsub.f32 %v818, %v1011
    %v1024 = vsub.f32 %v819, %v1012
    %v1025 = vsub.f32 %v820, %v1013
    %v1026 = vsub.f32 %v821, %v1014
    %v1027 = vsub.f32 %v822, %v1015
    %v1028 = vsub.f32 %v823, %v1016
    %v1029 = vsub.f32 %v824, %v1017
    %v1030 = vmul.f32 %v80, %v915
    %v1031 = vmul.f32 %v81, %v921
    %v1032 = vmul.f32 %v82, %v927
    %v1033 = vmul.f32 %v83, %v933
    %v1034 = vmul.f32 %v84, %v939
    %v1035 = vmul.f32 %v85, %v945
    %v1036 = vmul.f32 %v86, %v951
    %v1037 = vmul.f32 %v87, %v957
    %v1038 = vmul.f32 %v88, %v963
    %v1039 = vmul.f32 %v89, %v969
    %v1040 = vmul.f32 %v90, %v975
    %v1041 = vmul.f32 %v91, %v981
    %v1054 = vrot.slane %v982, 4
    %v1055 = vrot.slane %v983, 4
    %v1056 = vrot.slane %v984, 4
    %v1057 = vrot.slane %v985, 4
    %v1058 = vrot.slane %v986, 4
    %v1059 = vrot.slane %v987, 4
    %v1060 = vrot.slane %v988, 4
    %v1061 = vrot.slane %v989, 4
    %v1062 = vrot.slane %v990, 4
    %v1063 = vrot.slane %v991, 4
    %v1064 = vrot.slane %v992, 4
    %v1065 = vrot.slane %v993, 4
    %v1090 = vrot.slane %v994, 3
    %v1091 = vrot.slane %v995, 3
    %v1092 = vrot.slane %v996, 3
    %v1093 = vrot.slane %v997, 3
    %v1094 = vrot.slane %v998, 3
    %v1095 = vrot.slane %v999, 3
    %v1096 = vrot.slane %v1000, 3
    %v1097 = vrot.slane %v1001, 3
    %v1098 = vrot.slane %v1002, 3
    %v1099 = vrot.slane %v1003, 3
    %v1100 = vrot.slane %v1004, 3
    %v1101 = vrot.slane %v1005, 3
    %v1126 = vrot.slane %v1006, 2
    %v1127 = vrot.slane %v1007, 2
    %v1128 = vrot.slane %v1008, 2
    %v1129 = vrot.slane %v1009, 2
    %v1130 = vrot.slane %v1010, 2
    %v1131 = vrot.slane %v1011, 2
    %v1132 = vrot.slane %v1012, 2
    %v1133 = vrot.slane %v1013, 2
    %v1134 = vrot.slane %v1014, 2
    %v1135 = vrot.slane %v1015, 2
    %v1136 = vrot.slane %v1016, 2
    %v1137 = vrot.slane %v1017, 2
    %v1162 = vrot.slane %v1018, 1
    %v1163 = vrot.slane %v1019, 1
    %v1164 = vrot.slane %v1020, 1
    %v1165 = vrot.slane %v1021, 1
    %v1166 = vrot.slane %v1022, 1
    %v1167 = vrot.slane %v1023, 1
    %v1168 = vrot.slane %v1024, 1
    %v1169 = vrot.slane %v1025, 1
    %v1170 = vrot.slane %v1026, 1
    %v1171 = vrot.slane %v1027, 1
    %v1172 = vrot.slane %v1028, 1
    %v1173 = vrot.slane %v1029, 1
    %v1198 = vrot.slane %v80, 7
    %v1199 = vrot.slane %v81, 7
    %v1200 = vrot.slane %v82, 7
    %v1201 = vrot.slane %v83, 7
    %v1202 = vrot.slane %v84, 7
    %v1203 = vrot.slane %v85, 7
    %v1204 = vrot.slane %v86, 7
    %v1205 = vrot.slane %v87, 7
    %v1206 = vrot.slane %v88, 7
    %v1207 = vrot.slane %v89, 7
    %v1208 = vrot.slane %v90, 7
    %v1209 = vrot.slane %v91, 7
    %vm1222 = vcmask 1040384
    %v1223 = vsel %vm1222, %v1054, %v1090
    %v1224 = vsel %vm1222, %v1055, %v1091
    %v1225 = vsel %vm1222, %v1056, %v1092
    %v1226 = vsel %vm1222, %v1057, %v1093
    %v1227 = vsel %vm1222, %v1058, %v1094
    %v1228 = vsel %vm1222, %v1059, %v1095
    %v1229 = vsel %vm1222, %v1060, %v1096
    %v1230 = vsel %vm1222, %v1061, %v1097
    %v1231 = vsel %vm1222, %v1062, %v1098
    %v1232 = vsel %vm1222, %v1063, %v1099
    %v1233 = vsel %vm1222, %v1064, %v1100
    %v1234 = vsel %vm1222, %v1065, %v1101
    %v1235 = vsel %vm212, %v1223, %v1126
    %v1236 = vsel %vm212, %v1224, %v1127
    %v1237 = vsel %vm212, %v1225, %v1128
    %v1238 = vsel %vm212, %v1226, %v1129
    %v1239 = vsel %vm212, %v1227, %v1130
    %v1240 = vsel %vm212, %v1228, %v1131
    %v1241 = vsel %vm212, %v1229, %v1132
    %v1242 = vsel %vm212, %v1230, %v1133
    %v1243 = vsel %vm212, %v1231, %v1134
    %v1244 = vsel %vm212, %v1232, %v1135
    %v1245 = vsel %vm212, %v1233, %v1136
    %v1246 = vsel %vm212, %v1234, %v1137
    %v1247 = vsel %vm861, %v1235, %v1162
    %v1248 = vsel %vm861, %v1236, %v1163
    %v1249 = vsel %vm861, %v1237, %v1164
    %v1250 = vsel %vm861, %v1238, %v1165
    %v1251 = vsel %vm861, %v1239, %v1166
    %v1252 = vsel %vm861, %v1240, %v1167
    %v1253 = vsel %vm861, %v1241, %v1168
    %v1254 = vsel %vm861, %v1242, %v1169
    %v1255 = vsel %vm861, %v1243, %v1170
    %v1256 = vsel %vm861, %v1244, %v1171
    %v1257 = vsel %vm861, %v1245, %v1172
    %v1258 = vsel %vm861, %v1246, %v1173
    %vm1259 = vcmask 1043456
    %v1260 = vsel %vm1259, %v1247, %v1030
    %v1261 = vsel %vm1259, %v1248, %v1031
    %v1262 = vsel %vm1259, %v1249, %v1032
    %v1263 = vsel %vm1259, %v1250, %v1033
    %v1264 = vsel %vm1259, %v1251, %v1034
    %v1265 = vsel %vm1259, %v1252, %v1035
    %v1266 = vsel %vm1259, %v1253, %v1036
    %v1267 = vsel %vm1259, %v1254, %v1037
    %v1268 = vsel %vm1259, %v1255, %v1038
    %v1269 = vsel %vm1259, %v1256, %v1039
    %v1270 = vsel %vm1259, %v1257, %v1040
    %v1271 = vsel %vm1259, %v1258, %v1041
    %vm1272 = vcmask 1044480
    %v1273 = vsel %vm1272, %v1260, %v1198
    %v1274 = vsel %vm1272, %v1261, %v1199
    %v1275 = vsel %vm1272, %v1262, %v1200
    %v1276 = vsel %vm1272, %v1263, %v1201
    %v1277 = vsel %vm1272, %v1264, %v1202
    %v1278 = vsel %vm1272, %v1265, %v1203
    %v1279 = vsel %vm1272, %v1266, %v1204
    %v1280 = vsel %vm1272, %v1267, %v1205
    %v1281 = vsel %vm1272, %v1268, %v1206
    %v1282 = vsel %vm1272, %v1269, %v1207
    %v1283 = vsel %vm1272, %v1270, %v1208
    %v1284 = vsel %vm1272, %v1271, %v1209
    %vm1285 = vcmask 1045504
    %v1286 = vsel %vm1285, %v1273, 0.0
    %v1287 = vsel %vm1285, %v1274, 0.0
    %v1288 = vsel %vm1285, %v1275, 0.0
    %v1289 = vsel %vm1285, %v1276, 0.0
    %v1290 = vsel %vm1285, %v1277, 0.0
    %v1291 = vsel %vm1285, %v1278, 0.0
    %v1292 = vsel %vm1285, %v1279, 0.0
    %v1293 = vsel %vm1285, %v1280, 0.0
    %v1294 = vsel %vm1285, %v1281, 0.0
    %v1295 = vsel %vm1285, %v1282, 0.0
    %v1296 = vsel %vm1285, %v1283, 0.0
    %v1297 = vsel %vm1285, %v1284, 0.0
    %v1298 = vld [vmem:[#allocation2] sm:$0xff]
    %v1299 = vld [vmem:[#allocation2 + $0x8] sm:$0xff]
    %v1300 = vld [vmem:[#allocation2 + $0x10] sm:$0xff]
    %v1301 = vld [vmem:[#allocation2 + $0x18] sm:$0xff]
    %v1302 = vld [vmem:[#allocation2 + $0x20] sm:$0xff]
    %v1303 = vld [vmem:[#allocation2 + $0x28] sm:$0xff]
    %v1304 = vld [vmem:[#allocation2 + $0x30] sm:$0xff]
    %v1305 = vld [vmem:[#allocation2 + $0x38] sm:$0xff]
    %v1306 = vld [vmem:[#allocation2 + $0x40] sm:$0xff]
    %v1307 = vld [vmem:[#allocation2 + $0x48] sm:$0xff]
    %v1308 = vld [vmem:[#allocation2 + $0x50] sm:$0xff]
    %v1309 = vld [vmem:[#allocation2 + $0x58] sm:$0xff]
    %v1310 = vadd.f32 %v1298, %v1286
    %v1311 = vadd.f32 %v1299, %v1287
    %v1312 = vadd.f32 %v1300, %v1288
    %v1313 = vadd.f32 %v1301, %v1289
    %v1314 = vadd.f32 %v1302, %v1290
    %v1315 = vadd.f32 %v1303, %v1291
    %v1316 = vadd.f32 %v1304, %v1292
    %v1317 = vadd.f32 %v1305, %v1293
    %v1318 = vadd.f32 %v1306, %v1294
    %v1319 = vadd.f32 %v1307, %v1295
    %v1320 = vadd.f32 %v1308, %v1296
    %v1321 = vadd.f32 %v1309, %v1297
    %1322 = vst [vmem:[#allocation2] sm:$0xff] %v1310
    %1323 = vst [vmem:[#allocation2 + $0x8] sm:$0xff] %v1311
    %1324 = vst [vmem:[#allocation2 + $0x10] sm:$0xff] %v1312
    %1325 = vst [vmem:[#allocation2 + $0x18] sm:$0xff] %v1313
    %1326 = vst [vmem:[#allocation2 + $0x20] sm:$0xff] %v1314
    %1327 = vst [vmem:[#allocation2 + $0x28] sm:$0xff] %v1315
    %1328 = vst [vmem:[#allocation2 + $0x30] sm:$0xff] %v1316
    %1329 = vst [vmem:[#allocation2 + $0x38] sm:$0xff] %v1317
    %1330 = vst [vmem:[#allocation2 + $0x40] sm:$0xff] %v1318
    %1331 = vst [vmem:[#allocation2 + $0x48] sm:$0xff] %v1319
    %1332 = vst [vmem:[#allocation2 + $0x50] sm:$0xff] %v1320
    %1333 = vst [vmem:[#allocation2 + $0x58] sm:$0xff] %v1321
    // Predicated region
    $region22: #{tpu_custom_call.1} parent=1 // pred_check
      %p1334 = pneg %p40
    $region23: #{tpu_custom_call.1} parent=1 // pred_check_branch
      %1336 = sbr.rel (%p1334) target = $region25
    $region24: #{tpu_custom_call.1} parent=1 // pred_region
      %v1337 = vld [vmem:[#allocation2] sm:$0xff]
      %v1338 = vld [vmem:[#allocation2 + $0x8] sm:$0xff]
      %v1339 = vld [vmem:[#allocation2 + $0x10] sm:$0xff]
      %v1340 = vld [vmem:[#allocation2 + $0x18] sm:$0xff]
      %v1341 = vld [vmem:[#allocation2 + $0x20] sm:$0xff]
      %v1342 = vld [vmem:[#allocation2 + $0x28] sm:$0xff]
      %v1343 = vld [vmem:[#allocation2 + $0x30] sm:$0xff]
      %v1344 = vld [vmem:[#allocation2 + $0x38] sm:$0xff]
      %v1345 = vld [vmem:[#allocation2 + $0x40] sm:$0xff]
      %v1346 = vld [vmem:[#allocation2 + $0x48] sm:$0xff]
      %v1347 = vld [vmem:[#allocation2 + $0x50] sm:$0xff]
      %v1348 = vld [vmem:[#allocation2 + $0x58] sm:$0xff]
      %v1349 = vadd.f32 %v1337, %v1338
      %v1350 = vadd.f32 %v1349, %v1339
      %v1351 = vadd.f32 %v1350, %v1340
      %v1352 = vadd.f32 %v1351, %v1341
      %v1353 = vadd.f32 %v1352, %v1342
      %v1354 = vadd.f32 %v1353, %v1343
      %v1355 = vadd.f32 %v1354, %v1344
      %v1356 = vadd.f32 %v1355, %v1345
      %v1357 = vadd.f32 %v1356, %v1346
      %v1358 = vadd.f32 %v1357, %v1347
      %v1359 = vadd.f32 %v1358, %v1348
      %1360 = vadd.xlane.f32.xlu0 %v1359
      %v1361 = vpop.xlane.xlu0 %1360
      %1362 = vst [vmem:[#allocation8] sm:$0xff] %v1361
    $region25: #{tpu_custom_call.1} parent=1 // pred_fallthru
      _
    // Predicated region
    $region26: #{tpu_custom_call.1} parent=1 // pred_check
      _
    $region27: #{tpu_custom_call.1} parent=1 // pred_check_branch
      %1364 = sbr.rel (0) target = $region29
    $region28: #{tpu_custom_call.1} parent=1 // pred_region
      %s1366 = ssub.s32 128, 128
      %1367 = vsyncadd [#allocation5], %s1366
      %s1369 = sshll.u32 [#allocation8], 4
      %s1370 = int_to_ptr.vmem [resolvable:$true] %s1369
      %1372 = dma.vmem_to_hbm [thread:$0]  %s1370, 128, %s2, [#allocation5]
    $region29: #{tpu_custom_call.1} parent=1 // pred_fallthru
      _
    // Predicated region
    $region30: #{tpu_custom_call.1} parent=1 // pred_check
      _
    $region31: #{tpu_custom_call.1} parent=1 // pred_check_branch
      %1374 = sbr.rel (0) target = $region33
    $region32: #{tpu_custom_call.1} parent=1 // pred_region
      %1375 = dma.done [#allocation5], 128
    $region33: #{tpu_custom_call.1} parent=1 // pred_fallthru
      _
    %1376 = vsyncpa [#allocation4], 1
    %1377 = vsyncpa [#allocation7], 1
    %1378 = vsyncpa [#allocation5], 1

</llo_original>
